<compile_context>
chip_gen: v7x
topology: tpu7x:2x2x1
jax: 0.10.0
libtpu: 0.0.40
codegen_flags: <defaults>
</compile_context>

<pallas_src>
import jax
import jax.numpy as jnp
from jax.experimental import pallas as pl
from jax.experimental.pallas import tpu as pltpu


def _repeat_last_kernel(x_ref, o_ref):
    # x_ref: (1, T,  L)  all timesteps of this batch's lane chunk (VMEM)
    # o_ref: (1, Ff, L)  chunk of the output future axis
    t_last = x_ref.shape[1] - 1
    last = x_ref[:, t_last:t_last + 1, :]          # (1, 1, L), static slice
    o_ref[...] = jnp.broadcast_to(last, o_ref.shape)


def _choose_tiles(F, T, CHW, itemsize, budget_bytes=20 << 20):
    """Pick (future_tile, lane_tile) from a VMEM budget.

    Budget covers the double-buffered output block (F rows) plus the
    double-buffered input block (T rows) at the chosen lane width.
    """
    # Sublane-packing granularity for the second-minor output dim:
    # 8 rows/vreg for 32-bit, 16 for bf16/fp16, 32 for int8/fp8.
    sub = max(8, 32 // max(itemsize, 1))

    rows = 2 * (F + T)                       # double-buffered in + out rows
    max_lanes = budget_bytes // (rows * itemsize)

    if CHW <= max_lanes or CHW < 128:
        # Full last dim in one chunk (legal even if not a 128-multiple).
        l_tile = CHW
    else:
        # Largest lane-dense (128-multiple) chunk that fits the budget; the
        # final lane chunk (if partial) gets masked stores, everything else
        # is unmasked vst.
        l_tile = max(128, (max_lanes // 128) * 128)

    # Whole future axis in one block if it fits; otherwise a sublane-packed
    # chunk of it.
    f_tile = F
    if 2 * (F + T) * l_tile * itemsize > budget_bytes and F > sub:
        avail = budget_bytes // (2 * l_tile * itemsize) - T
        f_tile = max(sub, (avail // sub) * sub)
        f_tile = min(f_tile, F)

    return f_tile, l_tile


def no_model_forward(x, future_steps=30, hidden_state=None):
    """Pallas equivalent of NoModel.forward.

    x: (B, T, C, H, W) -> (B, future_steps, C, H, W)
    hidden_state is ignored (matches the PyTorch module).
    """
    B, T, C, H, W = x.shape
    F = int(future_steps)
    CHW = C * H * W
    itemsize = x.dtype.itemsize

    # Metadata-only reshape of the contiguous input; no extra HBM traffic.
    x_flat = x.reshape(B, T, CHW)

    f_tile, l_tile = _choose_tiles(F, T, CHW, itemsize)
    n_l = pl.cdiv(CHW, l_tile)
    n_f = pl.cdiv(F, f_tile)

    # Input block index is constant in f (innermost axis) -> fetched once per
    # (batch, lane-chunk); Pallas skips the repeated DMA across f.
    in_spec = pl.BlockSpec((1, T, l_tile), lambda b, l, f: (b, 0, l))
    out_spec = pl.BlockSpec((1, f_tile, l_tile), lambda b, l, f: (b, f, l))

    cost = pl.CostEstimate(
        flops=0,
        transcendentals=0,
        bytes_accessed=(B * T * CHW + B * F * CHW) * itemsize,
    )

    out_flat = pl.pallas_call(
        _repeat_last_kernel,
        out_shape=jax.ShapeDtypeStruct((B, F, CHW), x.dtype),
        grid_spec=pltpu.PrefetchScalarGridSpec(
            num_scalar_prefetch=0,
            grid=(B, n_l, n_f),
            in_specs=[in_spec],
            out_specs=out_spec,
        ),
        compiler_params=pltpu.CompilerParams(
            # Pure broadcast: every output block is written exactly once, so
            # all axes (incl. f) are independent -> let megacore shard any.
            dimension_semantics=("parallel", "parallel", "parallel"),
            # Explicit scoped-VMEM limit: raises v5e's 16 MiB default, equals
            # the v6e/v7x default, and leaves headroom under v7x's 64 MiB
            # physical VMEM for the ~20 MiB tile budget above.
            vmem_limit_bytes=32 * 1024 * 1024,
        ),
        cost_estimate=cost,
    )(x_flat)

    return out_flat.reshape(B, F, C, H, W)


if __name__ == "__main__":
    key = jax.random.PRNGKey(0)
    B, T, C, H, W = 2, 3, 4, 16, 16
    future_steps = 6

    x = jax.random.normal(key, (B, T, C, H, W), dtype=jnp.float32)

    out = no_model_forward(x, future_steps=future_steps)
    out = jax.block_until_ready(out)

    # reference: stack last timestep future_steps times along axis 1
    ref = jnp.stack([x[:, -1]] * future_steps, axis=1)
    assert out.shape == (B, future_steps, C, H, W), out.shape
    assert jnp.array_equal(out, ref), "mismatch vs reference"

    print("KERNEL_OK")
</pallas_src>

<mosaic_0001>
module attributes {stable_mosaic.version = 11 : i64} {
  func.func @_repeat_last_kernel(%arg0: i32, %arg1: i32, %arg2: i32, %arg3: memref<1x3x1024xf32, #tpu.memory_space<vmem>>, %arg4: memref<1x6x1024xf32, #tpu.memory_space<vmem>>) attributes {dimension_semantics = [#tpu.dimension_semantics<parallel>, #tpu.dimension_semantics<parallel>, #tpu.dimension_semantics<parallel>], iteration_bounds = array<i64: 2, 1, 1>, scalar_prefetch = 0 : i64, scratch_operands = 0 : i64, tpu.core_type = #tpu.core_type<tc>, window_params = [{transform_indices = @transform_0, window_bounds = array<i64: 1, 3, 1024>}, {transform_indices = @transform_1, window_bounds = array<i64: 1, 6, 1024>}]} {
    %c0 = arith.constant 0 : index
    %c2 = arith.constant 2 : index
    %c0_0 = arith.constant 0 : index
    %0 = vector.load %arg3[%c0, %c2, %c0_0] : memref<1x3x1024xf32, #tpu.memory_space<vmem>>, vector<1x1x1024xf32>
    %1 = vector.shape_cast %0 : vector<1x1x1024xf32> to vector<1x1x1024xf32>
    %2 = vector.broadcast %1 : vector<1x1x1024xf32> to vector<1x6x1024xf32>
    %c0_1 = arith.constant 0 : index
    %c0_2 = arith.constant 0 : index
    %c0_3 = arith.constant 0 : index
    %3 = vector.load %arg4[%c0_1, %c0_2, %c0_3] : memref<1x6x1024xf32, #tpu.memory_space<vmem>>, vector<1x6x1024xf32>
    tpu.vector_store %arg4[%c0_1, %c0_2, %c0_3], %2 {strides = array<i32>} : memref<1x6x1024xf32, #tpu.memory_space<vmem>>, vector<1x6x1024xf32>,
    return
  }
  func.func @transform_0(%arg0: i32, %arg1: i32, %arg2: i32) -> (i32, i32, i32) {
    %c0_i32 = arith.constant 0 : i32
    %c0_i32_0 = arith.constant 0 : i32
    return %arg0, %c0_i32, %arg1 : i32, i32, i32
  }
  func.func @transform_1(%arg0: i32, %arg1: i32, %arg2: i32) -> (i32, i32, i32) {
    %c0_i32 = arith.constant 0 : i32
    return %arg0, %arg2, %arg1 : i32, i32, i32
  }
}

</mosaic_0001>

<llo_original>
// kernel: tpu_custom_call.1
$region0: #{tpu_custom_call.1}
  #allocation0 [shape = 'u32[]', space=smem, size = 0x4, offset = 0x4, fixed_abs, tag = 'smem constant byte address 0x4 - core index']
  #allocation1 [shape = 'u32[144,128]{1,0:T(1,128)}', space=vmem, size = 0x12000, scoped, tag = 'internal scratch']
  %s0 = inlined_call_operand.vmem [shape: f32[2,3,1024], index: 0, kind: input, shape index: {}]
  %s1 = inlined_call_operand.vmem [shape: f32[2,6,1024], index: 1, kind: output, shape index: {}]
  %s2 = sld [smem:[#allocation0]]
  $region37: #{tpu_custom_call.1} parent=0
    _
  %s4 = ssub.s32 1, %s2
  %s5 = scalar_select 0, %s4, %s2
  loop: start=0, step=1, limit=4
  $region2: #{tpu_custom_call.1} parent=0 // loop_pre_header
    _
  $region3: #{tpu_custom_call.1} parent=0 // loop_header
    %s7 = sphi 0, %s11
    %p8 = scmp.ge.s32.totalorder %s7, 4
    %s14 = sphi 0, %s33
    %s15 = sphi 0, %s29
    %s16 = sphi 0, %s25
    %s17 = sphi 0, %s14
    %s18 = sphi 0, %s15
    %s19 = sphi 0, %s16
    %s20 = sphi 0, %s17
    %s21 = sphi 0, %s18
    %s22 = sphi 0, %s19
    %s38 = sphi 0, %s40
    %s41 = sphi 0, %s38
    %s42 = sphi 0, %s41
    %s58 = sphi 0, %s42
    %s68 = sphi 0, %s70
    %s71 = sphi 0, %s68
    %s72 = sphi 0, %s71
    %s88 = sphi 0, %s72
  $region4: #{tpu_custom_call.1} parent=0 // loop_header_branch
    %10 = sbr.rel (%p8) target = $region8
  $region5: #{tpu_custom_call.1} parent=0 // loop_body
    %s12 = ssub.s32 %s7, 1
    %s13 = ssub.s32 %s7, 2
    %s23 = sadd.s32 1, %s16
    %p24 = scmp.ge.s32.totalorder %s23, 1
    %s25 = scalar_select %p24, 0, %s23
    %s26 = sadd.s32 1, %s15
    %s27 = scalar_select %p24, %s26, %s15
    %p28 = scmp.ge.s32.totalorder %s27, 1
    %s29 = scalar_select %p28, 0, %s27
    %s30 = sadd.s32 1, %s14
    %s31 = scalar_select %p28, %s30, %s14
    %p32 = scmp.ge.s32.totalorder %s31, 2
    %s33 = scalar_select %p32, 0, %s31
    %s34 = ssub.s32 %s14, %s33
    %s35 = ssub.s32 %s15, %s29
    %s36 = sor.u32 %s34, %s35
    %p37 = scmp.eq.s32.totalorder %s36, 0
    %s39 = sadd.s32 %s38, 1
    %s40 = scalar_select %p37, %s38, %s39
    %p43 = pneg %p37
    %p44 = scmp.eq.s32.totalorder %s7, 1
    %p45 = por %p43, %p44
    %p46 = scmp.ne.s32.totalorder %s38, %s41
    %p47 = scmp.eq.s32.totalorder %s7, 0
    %p48 = por %p46, %p47
    %p49 = scmp.ne.s32.totalorder %s38, %s41
    %p50 = scmp.eq.s32.totalorder %s12, 1
    %p51 = por %p49, %p50
    %p52 = scmp.ne.s32.totalorder %s41, %s42
    %p53 = scmp.eq.s32.totalorder %s12, 0
    %p54 = por %p52, %p53
    %p55 = scmp.ne.s32.totalorder %s41, %s42
    %p56 = scmp.eq.s32.totalorder %s13, 1
    %p57 = por %p55, %p56
    %p59 = scmp.ne.s32.totalorder %s42, %s58
    %p60 = scmp.eq.s32.totalorder %s13, 0
    %p61 = por %p59, %p60
    %s62 = ssub.s32 %s14, %s33
    %s63 = ssub.s32 %s16, %s25
    %s64 = sor.u32 %s62, %s63
    %s65 = ssub.s32 %s15, %s29
    %s66 = sor.u32 %s64, %s65
    %p67 = scmp.eq.s32.totalorder %s66, 0
    %s69 = sadd.s32 %s68, 1
    %s70 = scalar_select %p67, %s68, %s69
    %p73 = pneg %p67
    %p74 = scmp.eq.s32.totalorder %s7, 1
    %p75 = por %p73, %p74
    %p76 = scmp.ne.s32.totalorder %s68, %s71
    %p77 = scmp.eq.s32.totalorder %s7, 0
    %p78 = por %p76, %p77
    %p79 = scmp.ne.s32.totalorder %s68, %s71
    %p80 = scmp.eq.s32.totalorder %s12, 1
    %p81 = por %p79, %p80
    %p82 = scmp.ne.s32.totalorder %s71, %s72
    %p83 = scmp.eq.s32.totalorder %s12, 0
    %p84 = por %p82, %p83
    %p85 = scmp.ne.s32.totalorder %s71, %s72
    %p86 = scmp.eq.s32.totalorder %s13, 1
    %p87 = por %p85, %p86
    %p89 = scmp.ne.s32.totalorder %s72, %s88
    %p90 = scmp.eq.s32.totalorder %s13, 0
    %p91 = por %p89, %p90
    %p92 = scmp.le.s32.totalorder 1, %s7
    %p93 = scmp.lt.s32.totalorder %s7, 3
    %p94 = pnand %p92, %p93
    %p95 = pneg %p94
    // Predicated region
    $region9: #{tpu_custom_call.1} parent=5 // pred_check
      _
    $region10: #{tpu_custom_call.1} parent=5 // pred_check_branch
      %97 = sbr.rel (%p94) target = $region12
    $region11: #{tpu_custom_call.1} parent=5 // pred_region
      %s98 = ssub.s32 %s7, 1
    $region12: #{tpu_custom_call.1} parent=5 // pred_fallthru
      _
    %p99 = scmp.lt.s32.totalorder %s7, 2
    // Predicated region
    $region13: #{tpu_custom_call.1} parent=5 // pred_check
      %p100 = pneg %p99
    $region14: #{tpu_custom_call.1} parent=5 // pred_check_branch
      %102 = sbr.rel (%p100) target = $region16
    $region15: #{tpu_custom_call.1} parent=5 // pred_region
      // Predicated region
      $region17: #{tpu_custom_call.1} parent=15 // pred_check
        %p103 = pneg %p48
      $region18: #{tpu_custom_call.1} parent=15 // pred_check_branch
        %105 = sbr.rel (%p103) target = $region20
      $region19: #{tpu_custom_call.1} parent=15 // pred_region
        %s106 = smul.u32 8, %s15
        %p107 = scmp.lt.s32.totalorder %s14, 1
        %s108 = scalar_select %p107, %s14, 1
        %p109 = scmp.lt.s32.totalorder %s106, 7
        %s110 = scalar_select %p109, %s106, 7
        %s111 = smul.addr %s108, 8
        %s112 = sadd.s32 %s110, %s111
        %s113 = smul.addr %s112, 4
        %s114 = scalar_lea.vmem %s0, %s113
        %s115 = smul.u32 8, %s15
      $region20: #{tpu_custom_call.1} parent=15 // pred_fallthru
        _
    $region16: #{tpu_custom_call.1} parent=5 // pred_fallthru
      _
    %p116 = scmp.le.s32.totalorder 1, %s7
    %p117 = scmp.lt.s32.totalorder %s7, 3
    %p118 = pnand %p116, %p117
    %p119 = pneg %p118
    // Predicated region
    $region21: #{tpu_custom_call.1} parent=5 // pred_check
      _
    $region22: #{tpu_custom_call.1} parent=5 // pred_check_branch
      %121 = sbr.rel (%p118) target = $region24
    $region23: #{tpu_custom_call.1} parent=5 // pred_region
      %s122 = ssub.s32 %s7, 1
      %s123 = smul.u32 8, %s18
      %p124 = scmp.lt.s32.totalorder %s17, 1
      %s125 = scalar_select %p124, %s17, 1
      %p126 = scmp.lt.s32.totalorder %s123, 7
      %s127 = scalar_select %p126, %s123, 7
      %s128 = smul.addr %s125, 8
      %s129 = sadd.s32 %s127, %s128
      %s130 = smul.addr %s129, 4
      %s131 = scalar_lea.vmem %s0, %s130
      %p132 = pneg %p54
      %p133 = pneg %p51
      %p134 = pneg %p84
      %p135 = pneg %p81
      %s136 = smul.u32 8, %s18
      %p137 = scmp.lt.s32.totalorder %s17, 1
      %s138 = scalar_select %p137, %s17, 1
      %p139 = scmp.lt.s32.totalorder %s19, 0
      %s140 = scalar_select %p139, %s19, 0
      %p141 = scmp.lt.s32.totalorder %s136, 7
      %s142 = scalar_select %p141, %s136, 7
      %s143 = smul.addr %s140, 8
      %s144 = sadd.s32 %s142, %s143
      %s145 = smul.addr %s138, 8
      %s146 = sadd.s32 %s144, %s145
      %s147 = smul.addr %s146, 8
      %s148 = scalar_lea.vmem %s1, %s147
      %s149 = smul.u32 8, %s18
      %p150 = scmp.lt.s32.totalorder %s17, 1
      %s151 = scalar_select %p150, %s17, 1
      %p152 = scmp.lt.s32.totalorder %s149, 7
      %s153 = scalar_select %p152, %s149, 7
      %s154 = smul.addr %s151, 8
      %s155 = sadd.s32 %s153, %s154
      %s156 = smul.addr %s155, 4
      %s157 = scalar_lea.vmem %s0, %s156
      %s158 = smul.u32 8, %s18
      %s159 = smul.u32 8, %s18
      %p160 = scmp.lt.s32.totalorder %s17, 1
      %s161 = scalar_select %p160, %s17, 1
      %p162 = scmp.lt.s32.totalorder %s19, 0
      %s163 = scalar_select %p162, %s19, 0
      %p164 = scmp.lt.s32.totalorder %s159, 7
      %s165 = scalar_select %p164, %s159, 7
      %s166 = smul.addr %s163, 8
      %s167 = sadd.s32 %s165, %s166
      %s168 = smul.addr %s161, 8
      %s169 = sadd.s32 %s167, %s168
      %s170 = smul.addr %s169, 8
      %s171 = scalar_lea.vmem %s1, %s170
      %s172 = smul.u32 8, %s18
      %s173 = scalar_lea.vmem %s157, 2
      %v174 = vld [vmem:[%s173] ss:$4 sm:$0xff]
      %v176 = vlaneseq
      %v177 = vshrl.u32 %v176, 7
      %v178 = vsub.s32 0, %v177
      %v179 = vrot.slane %v174, %v178
      %v180 = vlaneseq
      %v181 = vshrl.u32 %v180, 7
      %v182 = vsub.s32 1, %v181
      %v183 = vrot.slane %v174, %v182
      %v184 = vlaneseq
      %v185 = vshrl.u32 %v184, 7
      %v186 = vsub.s32 2, %v185
      %v187 = vrot.slane %v174, %v186
      %v188 = vlaneseq
      %v189 = vshrl.u32 %v188, 7
      %v190 = vsub.s32 3, %v189
      %v191 = vrot.slane %v174, %v190
      %v192 = vlaneseq
      %v193 = vshrl.u32 %v192, 7
      %v194 = vsub.s32 4, %v193
      %v195 = vrot.slane %v174, %v194
      %v196 = vlaneseq
      %v197 = vshrl.u32 %v196, 7
      %v198 = vsub.s32 5, %v197
      %v199 = vrot.slane %v174, %v198
      %v200 = vlaneseq
      %v201 = vshrl.u32 %v200, 7
      %v202 = vsub.s32 6, %v201
      %v203 = vrot.slane %v174, %v202
      %v204 = vlaneseq
      %v205 = vshrl.u32 %v204, 7
      %v206 = vsub.s32 7, %v205
      %v207 = vrot.slane %v174, %v206
      %216 = vst [vmem:[%s171] sm:$0x3f] %v179
      %217 = vst [vmem:[%s171 + $0x8] sm:$0x3f] %v183
      %218 = vst [vmem:[%s171 + $0x10] sm:$0x3f] %v187
      %219 = vst [vmem:[%s171 + $0x18] sm:$0x3f] %v191
      %220 = vst [vmem:[%s171 + $0x20] sm:$0x3f] %v195
      %221 = vst [vmem:[%s171 + $0x28] sm:$0x3f] %v199
      %222 = vst [vmem:[%s171 + $0x30] sm:$0x3f] %v203
      %223 = vst [vmem:[%s171 + $0x38] sm:$0x3f] %v207
      %s224 = smul.u32 8, %s18
      %p225 = scmp.lt.s32.totalorder %s17, 1
      %s226 = scalar_select %p225, %s17, 1
      %p227 = scmp.lt.s32.totalorder %s19, 0
      %s228 = scalar_select %p227, %s19, 0
      %p229 = scmp.lt.s32.totalorder %s224, 7
      %s230 = scalar_select %p229, %s224, 7
      %s231 = smul.addr %s228, 8
      %s232 = sadd.s32 %s230, %s231
      %s233 = smul.addr %s226, 8
      %s234 = sadd.s32 %s232, %s233
      %s235 = smul.addr %s234, 8
      %s236 = scalar_lea.vmem %s1, %s235
      // Predicated region
      $region25: #{tpu_custom_call.1} parent=23 // pred_check
        %p237 = pneg %p81
      $region26: #{tpu_custom_call.1} parent=23 // pred_check_branch
        %239 = sbr.rel (%p237) target = $region28
      $region27: #{tpu_custom_call.1} parent=23 // pred_region
        %s240 = smul.u32 8, %s18
      $region28: #{tpu_custom_call.1} parent=23 // pred_fallthru
        _
    $region24: #{tpu_custom_call.1} parent=5 // pred_fallthru
      _
    %p241 = scmp.le.s32.totalorder 2, %s7
    // Predicated region
    $region29: #{tpu_custom_call.1} parent=5 // pred_check
      %p242 = pneg %p241
    $region30: #{tpu_custom_call.1} parent=5 // pred_check_branch
      %244 = sbr.rel (%p242) target = $region32
    $region31: #{tpu_custom_call.1} parent=5 // pred_region
      %s245 = ssub.s32 %s7, 2
      // Predicated region
      $region33: #{tpu_custom_call.1} parent=31 // pred_check
        %p246 = pneg %p87
      $region34: #{tpu_custom_call.1} parent=31 // pred_check_branch
        %248 = sbr.rel (%p246) target = $region36
      $region35: #{tpu_custom_call.1} parent=31 // pred_region
        %s249 = smul.u32 8, %s21
        %p250 = scmp.lt.s32.totalorder %s20, 1
        %s251 = scalar_select %p250, %s20, 1
        %p252 = scmp.lt.s32.totalorder %s22, 0
        %s253 = scalar_select %p252, %s22, 0
        %p254 = scmp.lt.s32.totalorder %s249, 7
        %s255 = scalar_select %p254, %s249, 7
        %s256 = smul.addr %s253, 8
        %s257 = sadd.s32 %s255, %s256
        %s258 = smul.addr %s251, 8
        %s259 = sadd.s32 %s257, %s258
        %s260 = smul.addr %s259, 8
        %s261 = scalar_lea.vmem %s1, %s260
      $region36: #{tpu_custom_call.1} parent=31 // pred_fallthru
        _
    $region32: #{tpu_custom_call.1} parent=5 // pred_fallthru
      _
  $region6: #{tpu_custom_call.1} parent=0 // loop_footer
    %s11 = sadd.s32 1, %s7
  $region7: #{tpu_custom_call.1} parent=0 // loop_footer_branch
    %6 = sbr.rel target = $region3
  $region8: #{tpu_custom_call.1} parent=0 // loop_exit
    _

</llo_original>
